<compile_context>
chip_gen: v7x
topology: tpu7x:2x2x1
jax: 0.10.0
libtpu: 0.0.40
codegen_flags: <defaults>
</compile_context>

<pallas_src>
import jax
import jax.numpy as jnp
from jax.experimental import pallas as pl
from jax.experimental.pallas import tpu as pltpu


_EPS = 1e-12  # matches torch.nn.functional.normalize default eps


def _adv_neg_kernel(q_ref, w_ref, mb_ref, logit_ref):
    w = w_ref[...]                                             # (C, TK) native dtype
    q = q_ref[...]                                             # (N, C)  native dtype

    # MXU starts on the raw W tile immediately (f32 accumulation).
    raw = jnp.dot(q, w, preferred_element_type=jnp.float32)    # (N, TK)

    # Column L2 norms: XLU sublane-reduce + EUP rsqrt overlap with the matmul.
    w32 = w.astype(jnp.float32)
    sq = jnp.sum(w32 * w32, axis=0, keepdims=True)             # (1, TK), f32 accumulation
    inv = jax.lax.rsqrt(jnp.maximum(sq, _EPS * _EPS))          # 1 / max(||w||, eps)

    if w_ref.dtype == jnp.float32:
        mb_ref[...] = (w32 * inv).astype(mb_ref.dtype)
    else:
        # bf16 etc.: multiply in the native dtype; avoids a full-tile f32
        # product + downcast pass (register-pressure win at 2048+ lane tiles).
        mb_ref[...] = (w * inv.astype(w.dtype)).astype(mb_ref.dtype)

    logit_ref[...] = (raw * inv).astype(logit_ref.dtype)       # (q @ w) * inv


def _tpu_vmem_bytes(default=64 << 20):
    """Physical per-core VMEM; conservative 64 MiB (v7x) fallback."""
    try:
        info = pltpu.get_tpu_info()
        v = getattr(info, "vmem_capacity_bytes", None)
        if v:
            return int(v)
    except Exception:
        pass
    return default


def _tpu_num_cores(default=1):
    """TensorCores per chip (v7x: 2). Clamped to [1, 2]; tuning hint only."""
    try:
        info = pltpu.get_tpu_info()
        for name in ("num_cores", "core_count", "num_tensorcores",
                     "tensorcore_count", "cores_per_chip"):
            v = getattr(info, name, None)
            if isinstance(v, int) and v > 0:
                return max(1, min(v, 2))
    except Exception:
        pass
    try:
        d = jax.devices()[0]
        for name in ("num_cores", "core_count"):
            v = getattr(d, name, None)
            if isinstance(v, int) and v > 0:
                return max(1, min(v, 2))
    except Exception:
        pass
    return default


def _pick_bank_tile(N, C, K, q_isz, w_isz, mb_isz, lg_isz, *,
                    vmem_bytes, num_cores):
    """Lane tile for the bank axis: as large as the generation's VMEM allows,
    but small enough that the 'parallel' K grid has >= 2*num_cores steps."""
    align = 128
    if K <= align:
        return K                                               # cannot split further

    # Soft working-set budget: half the physical VMEM (the terms below already
    # include the double-buffer factors); the rest is compiler scratch headroom.
    budget = vmem_bytes // 2
    max_tile = 4096 if vmem_bytes >= (96 << 20) else 2048

    fixed = N * C * q_isz                                      # q resident once (Buffered(1))
    per_lane = 2 * C * (w_isz + mb_isz) + 2 * N * lg_isz       # W in + mb/logit out, 2x-buffered

    tk = (budget - fixed) // max(per_lane, 1)
    tk = int((tk // align) * align)

    # Floor: keep lane tiles >= 512 even when N residency eats the soft budget,
    # as long as the physical VMEM can still hold the working set.
    if tk < 512:
        hard = max(vmem_bytes - (16 << 20) - fixed, 0)
        tk_hard = int(((hard // max(per_lane, 1)) // align) * align)
        tk = max(tk, min(512, tk_hard))
    # TODO(synk): for extremely large N, tile N as an outer "parallel" axis
    # (accepting W re-reads) instead of shrinking bank_tile; not needed here.

    tk = max(tk, align)
    tk = min(tk, max_tile)

    # Guarantee >= 2*num_cores grid steps so dimension_semantics=("parallel",)
    # spreads this mem-bound K stream across all TensorCores (v7x: 2 TCs/chip).
    min_steps = 2 * max(1, num_cores)
    cap = max((pl.cdiv(K, min_steps) // align) * align, align)
    tk = min(tk, cap)

    # v6e/v7x MXU is 256 wide: keep the output-column tile a multiple of 256
    # when it is big enough (128 alignment is already ideal on v5e's MXU).
    if tk >= 256:
        tk = (tk // 256) * 256

    return min(tk, K)


def adversary_negatives_forward(q, W, *, bank_tile=None):
    """Returns (memory_bank, W, logit) exactly like the PyTorch module."""
    N, C = q.shape
    C2, K = W.shape
    assert C == C2

    mb_dtype = W.dtype                                 # F.normalize preserves dtype
    logit_dtype = jnp.promote_types(q.dtype, W.dtype)  # einsum result dtype

    q_isz = jnp.dtype(q.dtype).itemsize
    w_isz = jnp.dtype(W.dtype).itemsize
    mb_isz = jnp.dtype(mb_dtype).itemsize
    lg_isz = jnp.dtype(logit_dtype).itemsize

    vmem_bytes = _tpu_vmem_bytes()
    num_cores = _tpu_num_cores()

    if bank_tile is None:
        bank_tile = _pick_bank_tile(N, C, K, q_isz, w_isz, mb_isz, lg_isz,
                                    vmem_bytes=vmem_bytes, num_cores=num_cores)
    bank_tile = min(int(bank_tile), K)

    num_k_tiles = pl.cdiv(K, bank_tile)                # partial last tile is masked
    grid = (num_k_tiles,)

    # Deeper W-stream buffering on 128 MiB-VMEM parts (v5e/v6e) when there is
    # something to hide; keep depth 2 on 64 MiB v7x.
    w_depth = 3 if (vmem_bytes >= (96 << 20) and num_k_tiles >= 3) else 2

    # Scoped-VMEM limit derived from actual need (+headroom), clamped only
    # against the generation's physical per-core VMEM.
    vmem_need = (2 * N * C * q_isz                      # q (2x: safe for fallback path)
                 + w_depth * C * bank_tile * w_isz      # streaming W tiles
                 + 2 * C * bank_tile * mb_isz           # memory_bank out
                 + 2 * N * bank_tile * lg_isz)          # logit out
    physical_cap = max(vmem_bytes - (16 << 20), 32 << 20)
    vmem_limit = int(min(physical_cap, max(32 << 20, vmem_need + (4 << 20))))

    cost = pl.CostEstimate(
        flops=2 * N * C * K,
        transcendentals=K,
        bytes_accessed=N * C * q_isz + C * K * (w_isz + mb_isz) + N * K * lg_isz,
    )

    def _run(use_pipeline_modes):
        if use_pipeline_modes and hasattr(pl, "Buffered"):
            # q's block index is constant across the grid: one resident copy.
            q_spec = pl.BlockSpec((N, C), lambda j: (0, 0),
                                  pipeline_mode=pl.Buffered(1))
            w_spec = pl.BlockSpec((C, bank_tile), lambda j: (0, j),
                                  pipeline_mode=pl.Buffered(w_depth))
        else:
            q_spec = pl.BlockSpec((N, C), lambda j: (0, 0))
            w_spec = pl.BlockSpec((C, bank_tile), lambda j: (0, j))

        return pl.pallas_call(
            _adv_neg_kernel,
            out_shape=(
                jax.ShapeDtypeStruct((C, K), mb_dtype),     # normalized memory bank
                jax.ShapeDtypeStruct((N, K), logit_dtype),  # logits
            ),
            grid_spec=pltpu.PrefetchScalarGridSpec(
                num_scalar_prefetch=0,
                grid=grid,
                in_specs=[q_spec, w_spec],
                out_specs=[
                    pl.BlockSpec((C, bank_tile), lambda j: (0, j)),  # memory_bank tile
                    pl.BlockSpec((N, bank_tile), lambda j: (0, j)),  # logit tile
                ],
            ),
            compiler_params=pltpu.CompilerParams(
                dimension_semantics=("parallel",),
                vmem_limit_bytes=vmem_limit,
            ),
            cost_estimate=cost,
        )(q, W)

    try:
        mb, logit = _run(True)
    except Exception:
        # Fallback for JAX builds without pipeline_mode / Buffered support;
        # default double-buffering is still correct, just uses more VMEM.
        mb, logit = _run(False)

    # The raw buffer W is returned unchanged (identity; no kernel needed).
    return mb, W, logit


def _reference(q, W):
    mb = W / jnp.maximum(jnp.sqrt(jnp.sum(W * W, axis=0, keepdims=True)), _EPS)
    return mb, W, q @ mb


if __name__ == "__main__":
    # Small shapes consistent with the module: bank_size=256, dim=32, batch n=8.
    bank_size = 256
    dim = 32
    n = 8

    key = jax.random.PRNGKey(0)
    k_w, k_q, k_w2 = jax.random.split(key, 3)

    # Deterministic "parameters" (buffers) from __init__: W ~ randn, v = zeros.
    W = jax.random.normal(k_w, (dim, bank_size), dtype=jnp.float32)
    v = jnp.zeros((dim, bank_size), dtype=jnp.float32)  # unused in forward
    # TODO(synk): `v` buffer and update()/print_weight() are optimizer-side methods,
    # not part of forward(); not implemented as kernels.

    q = jax.random.normal(k_q, (n, dim), dtype=jnp.float32)

    # 1) Default path: tile chooser guarantees >= 2 grid steps (both v7x TCs).
    memory_bank, W_out, logit = adversary_negatives_forward(q, W)
    jax.block_until_ready((memory_bank, W_out, logit))

    mb_ref, _, logit_ref = _reference(q, W)
    assert jnp.allclose(memory_bank, mb_ref, atol=1e-5, rtol=1e-5)
    assert jnp.allclose(logit, logit_ref, atol=1e-5, rtol=1e-5)
    assert jnp.array_equal(W_out, W)

    # 2) Forced multi-tile path (grid=2) to exercise the tiled BlockSpecs.
    mb2, _, logit2 = adversary_negatives_forward(q, W, bank_tile=128)
    jax.block_until_ready((mb2, logit2))
    assert jnp.allclose(mb2, mb_ref, atol=1e-5, rtol=1e-5)
    assert jnp.allclose(logit2, logit_ref, atol=1e-5, rtol=1e-5)

    # 3) K not a multiple of the tile: partial, masked last block (K=320, tile=128).
    K3 = 320
    W3 = jax.random.normal(k_w2, (dim, K3), dtype=jnp.float32)
    mb3, _, logit3 = adversary_negatives_forward(q, W3, bank_tile=128)
    jax.block_until_ready((mb3, logit3))
    mb3_ref, _, logit3_ref = _reference(q, W3)
    assert jnp.allclose(mb3, mb3_ref, atol=1e-5, rtol=1e-5)
    assert jnp.allclose(logit3, logit3_ref, atol=1e-5, rtol=1e-5)

    print("KERNEL_OK")
</pallas_src>

<mosaic_0001>
module attributes {stable_mosaic.version = 11 : i64} {
  func.func @_adv_neg_kernel(%arg0: i32, %arg1: memref<8x32xf32, #tpu.memory_space<vmem>>, %arg2: memref<32x128xf32, #tpu.memory_space<vmem>>, %arg3: memref<32x128xf32, #tpu.memory_space<vmem>>, %arg4: memref<8x128xf32, #tpu.memory_space<vmem>>) attributes {dimension_semantics = [#tpu.dimension_semantics<parallel>], iteration_bounds = array<i64: 2>, scalar_prefetch = 0 : i64, scratch_operands = 0 : i64, tpu.core_type = #tpu.core_type<tc>, window_params = [{pipeline_mode = #tpu.pipeline_mode<synchronous>, transform_indices = @transform_0, window_bounds = array<i64: 8, 32>}, {pipeline_mode = #tpu.pipeline_mode<double_buffered>, transform_indices = @transform_1, window_bounds = array<i64: 32, 128>}, {transform_indices = @transform_2, window_bounds = array<i64: 32, 128>}, {transform_indices = @transform_3, window_bounds = array<i64: 8, 128>}]} {
    %c0 = arith.constant 0 : index
    %c0_0 = arith.constant 0 : index
    %0 = vector.load %arg2[%c0, %c0_0] : memref<32x128xf32, #tpu.memory_space<vmem>>, vector<32x128xf32>
    %c0_1 = arith.constant 0 : index
    %c0_2 = arith.constant 0 : index
    %1 = vector.load %arg1[%c0_1, %c0_2] : memref<8x32xf32, #tpu.memory_space<vmem>>, vector<8x32xf32>
    %cst = arith.constant dense<0.000000e+00> : vector<8x128xf32>
    %2 = tpu.matmul %1, %0, %cst {dimension_numbers = #tpu.dot_dimension_numbers<[1], [0], [0], [1], [0, 0, 1, 1], [], []>} : vector<8x32xf32>, vector<32x128xf32>, vector<8x128xf32> -> vector<8x128xf32>
    %3 = arith.mulf %0, %0 : vector<32x128xf32>
    %cst_3 = arith.constant dense<0.000000e+00> : vector<128xf32>
    %4 = vector.multi_reduction <add>, %3, %cst_3 [0] : vector<32x128xf32> to vector<128xf32>
    %5 = vector.shape_cast %4 : vector<128xf32> to vector<1x128xf32>
    %cst_4 = arith.constant 1.000000e-24 : f32
    %6 = vector.broadcast %cst_4 : f32 to vector<1x128xf32>
    %7 = arith.maximumf %5, %6 : vector<1x128xf32>
    %8 = math.rsqrt %7 : vector<1x128xf32>
    %9 = vector.broadcast %8 : vector<1x128xf32> to vector<32x128xf32>
    %10 = arith.mulf %0, %9 : vector<32x128xf32>
    %c0_5 = arith.constant 0 : index
    %c0_6 = arith.constant 0 : index
    %11 = vector.load %arg3[%c0_5, %c0_6] : memref<32x128xf32, #tpu.memory_space<vmem>>, vector<32x128xf32>
    tpu.vector_store %arg3[%c0_5, %c0_6], %10 {strides = array<i32>} : memref<32x128xf32, #tpu.memory_space<vmem>>, vector<32x128xf32>,
    %12 = vector.broadcast %8 : vector<1x128xf32> to vector<8x128xf32>
    %13 = arith.mulf %2, %12 : vector<8x128xf32>
    %c0_7 = arith.constant 0 : index
    %c0_8 = arith.constant 0 : index
    %14 = vector.load %arg4[%c0_7, %c0_8] : memref<8x128xf32, #tpu.memory_space<vmem>>, vector<8x128xf32>
    tpu.vector_store %arg4[%c0_7, %c0_8], %13 {strides = array<i32>} : memref<8x128xf32, #tpu.memory_space<vmem>>, vector<8x128xf32>,
    return
  }
  func.func @transform_0(%arg0: i32) -> (i32, i32) {
    %c0_i32 = arith.constant 0 : i32
    %c0_i32_0 = arith.constant 0 : i32
    %c0_i32_1 = arith.constant 0 : i32
    return %c0_i32, %c0_i32_0 : i32, i32
  }
  func.func @transform_1(%arg0: i32) -> (i32, i32) {
    %c0_i32 = arith.constant 0 : i32
    %c0_i32_0 = arith.constant 0 : i32
    return %c0_i32, %arg0 : i32, i32
  }
  func.func @transform_2(%arg0: i32) -> (i32, i32) {
    %c0_i32 = arith.constant 0 : i32
    %c0_i32_0 = arith.constant 0 : i32
    return %c0_i32, %arg0 : i32, i32
  }
  func.func @transform_3(%arg0: i32) -> (i32, i32) {
    %c0_i32 = arith.constant 0 : i32
    %c0_i32_0 = arith.constant 0 : i32
    return %c0_i32, %arg0 : i32, i32
  }
}

module attributes {stable_mosaic.version = 11 : i64} {
  func.func @_adv_neg_kernel(%arg0: i32, %arg1: memref<8x32xf32, #tpu.memory_space<vmem>>, %arg2: memref<32x128xf32, #tpu.memory_space<vmem>>, %arg3: memref<32x128xf32, #tpu.memory_space<vmem>>, %arg4: memref<8x128xf32, #tpu.memory_space<vmem>>) attributes {dimension_semantics = [#tpu.dimension_semantics<parallel>], iteration_bounds = array<i64: 2>, scalar_prefetch = 0 : i64, scratch_operands = 0 : i64, tpu.core_type = #tpu.core_type<tc>, window_params = [{pipeline_mode = #tpu.pipeline_mode<synchronous>, transform_indices = @transform_0, window_bounds = array<i64: 8, 32>}, {transform_indices = @transform_1, window_bounds = array<i64: 32, 128>}, {transform_indices = @transform_2, window_bounds = array<i64: 32, 128>}, {transform_indices = @transform_3, window_bounds = array<i64: 8, 128>}]} {
    %c0 = arith.constant 0 : index
    %c0_0 = arith.constant 0 : index
    %0 = vector.load %arg2[%c0, %c0_0] : memref<32x128xf32, #tpu.memory_space<vmem>>, vector<32x128xf32>
    %c0_1 = arith.constant 0 : index
    %c0_2 = arith.constant 0 : index
    %1 = vector.load %arg1[%c0_1, %c0_2] : memref<8x32xf32, #tpu.memory_space<vmem>>, vector<8x32xf32>
    %cst = arith.constant dense<0.000000e+00> : vector<8x128xf32>
    %2 = tpu.matmul %1, %0, %cst {dimension_numbers = #tpu.dot_dimension_numbers<[1], [0], [0], [1], [0, 0, 1, 1], [], []>} : vector<8x32xf32>, vector<32x128xf32>, vector<8x128xf32> -> vector<8x128xf32>
    %3 = arith.mulf %0, %0 : vector<32x128xf32>
    %cst_3 = arith.constant dense<0.000000e+00> : vector<128xf32>
    %4 = vector.multi_reduction <add>, %3, %cst_3 [0] : vector<32x128xf32> to vector<128xf32>
    %5 = vector.shape_cast %4 : vector<128xf32> to vector<1x128xf32>
    %cst_4 = arith.constant 1.000000e-24 : f32
    %6 = vector.broadcast %cst_4 : f32 to vector<1x128xf32>
    %7 = arith.maximumf %5, %6 : vector<1x128xf32>
    %8 = math.rsqrt %7 : vector<1x128xf32>
    %9 = vector.broadcast %8 : vector<1x128xf32> to vector<32x128xf32>
    %10 = arith.mulf %0, %9 : vector<32x128xf32>
    %c0_5 = arith.constant 0 : index
    %c0_6 = arith.constant 0 : index
    %11 = vector.load %arg3[%c0_5, %c0_6] : memref<32x128xf32, #tpu.memory_space<vmem>>, vector<32x128xf32>
    tpu.vector_store %arg3[%c0_5, %c0_6], %10 {strides = array<i32>} : memref<32x128xf32, #tpu.memory_space<vmem>>, vector<32x128xf32>,
    %12 = vector.broadcast %8 : vector<1x128xf32> to vector<8x128xf32>
    %13 = arith.mulf %2, %12 : vector<8x128xf32>
    %c0_7 = arith.constant 0 : index
    %c0_8 = arith.constant 0 : index
    %14 = vector.load %arg4[%c0_7, %c0_8] : memref<8x128xf32, #tpu.memory_space<vmem>>, vector<8x128xf32>
    tpu.vector_store %arg4[%c0_7, %c0_8], %13 {strides = array<i32>} : memref<8x128xf32, #tpu.memory_space<vmem>>, vector<8x128xf32>,
    return
  }
  func.func @transform_0(%arg0: i32) -> (i32, i32) {
    %c0_i32 = arith.constant 0 : i32
    %c0_i32_0 = arith.constant 0 : i32
    %c0_i32_1 = arith.constant 0 : i32
    return %c0_i32, %c0_i32_0 : i32, i32
  }
  func.func @transform_1(%arg0: i32) -> (i32, i32) {
    %c0_i32 = arith.constant 0 : i32
    %c0_i32_0 = arith.constant 0 : i32
    return %c0_i32, %arg0 : i32, i32
  }
  func.func @transform_2(%arg0: i32) -> (i32, i32) {
    %c0_i32 = arith.constant 0 : i32
    %c0_i32_0 = arith.constant 0 : i32
    return %c0_i32, %arg0 : i32, i32
  }
  func.func @transform_3(%arg0: i32) -> (i32, i32) {
    %c0_i32 = arith.constant 0 : i32
    %c0_i32_0 = arith.constant 0 : i32
    return %c0_i32, %arg0 : i32, i32
  }
}

</mosaic_0001>

<llo_original>
// kernel: tpu_custom_call.1
$region0: #{tpu_custom_call.1}
  #allocation0 [shape = 'u32[]', space=smem, size = 0x4, offset = 0x4, fixed_abs, tag = 'smem constant byte address 0x4 - core index']
  #allocation1 [shape = 'u32[144,128]{1,0:T(1,128)}', space=vmem, size = 0x12000, scoped, tag = 'internal scratch']
  %s0 = inlined_call_operand.hbm [shape: f32[8,32], index: 0, kind: input, shape index: {}]
  %s1 = inlined_call_operand.hbm [shape: f32[32,256], index: 1, kind: input, shape index: {}]
  %s2 = inlined_call_operand.hbm [shape: f32[32,256], index: 2, kind: output, shape index: {0}]
  %s3 = inlined_call_operand.hbm [shape: f32[8,256], index: 3, kind: output, shape index: {1}]
  %4 = xla_tuple %s2, %s3
  %s5 = sld [smem:[#allocation0]]
  $region57: #{tpu_custom_call.1} parent=0
    _
  %s7 = ssub.s32 1, %s5
  %s8 = scalar_select 0, %s7, %s5
  $region1: #{tpu_custom_call.1} parent=0
    #allocation2 [shape = 'u8[4096]{0}', space=vmem, size = 0x1000, scoped, tag = 'input window, operand 0, single buffered']
    #allocation3 [shape = 's32[2]{0}', space=sflag, size = 0x8, scoped, tag = 'scoped memory for tpu_custom_call.1']
    #allocation4 [shape = 's32[2]{0}', space=sflag, size = 0x8, scoped, tag = 'scoped memory for tpu_custom_call.1']
    #allocation5 [shape = 'u8[32768]{0}', space=vmem, size = 0x8000, scoped, tag = 'input window, operand 1']
    #allocation6 [shape = 's32[2]{0}', space=sflag, size = 0x8, scoped, tag = 'scoped memory for tpu_custom_call.1']
    #allocation7 [shape = 'u8[32768]{0}', space=vmem, size = 0x8000, scoped, tag = 'output window, operand 0']
    #allocation8 [shape = 'u8[8192]{0}', space=vmem, size = 0x2000, scoped, tag = 'output window, operand 1']
    #allocation9 [shape = 's32[2]{0}', space=sflag, size = 0x8, scoped, tag = 'scoped memory for tpu_custom_call.1']
    %9 = vsyncpa [#allocation3], 0
    %10 = vsyncpa [#allocation6], 0
    %s11 = scalar_lea.sflag [#allocation6], 1
    %12 = vsyncpa %s11, 0
    %13 = vsyncpa [#allocation4], 0
    %s14 = scalar_lea.sflag [#allocation4], 1
    %15 = vsyncpa %s14, 0
    %16 = vsyncpa [#allocation9], 0
    %s17 = scalar_lea.sflag [#allocation9], 1
    %18 = vsyncpa %s17, 0
    loop: start=0, step=1, limit=4
    $region2: #{tpu_custom_call.1} parent=1 // loop_pre_header
      _
    $region3: #{tpu_custom_call.1} parent=1 // loop_header
      %s20 = sphi 0, %s24
      %p21 = scmp.ge.s32.totalorder %s20, 4
      %s28 = sphi 0, %s28
      %s30 = sphi 0, %s28
      %s31 = sphi 0, %s30
      %s45 = sphi 0, %s31
      %s51 = sphi 0, %s53
      %s54 = sphi 0, %s51
      %s55 = sphi 0, %s54
      %s71 = sphi 0, %s55
      %s77 = sphi 0, %s79
      %s80 = sphi 0, %s77
      %s81 = sphi 0, %s80
      %s97 = sphi 0, %s81
      %s103 = sphi 0, %s105
      %s106 = sphi 0, %s103
      %s107 = sphi 0, %s106
      %s123 = sphi 0, %s107
    $region4: #{tpu_custom_call.1} parent=1 // loop_header_branch
      %23 = sbr.rel (%p21) target = $region8
    $region5: #{tpu_custom_call.1} parent=1 // loop_body
      %s25 = ssub.s32 %s20, 1
      %s26 = ssub.s32 %s20, 2
      %s27 = sadd.s32 %s20, 1
      %s29 = sadd.s32 %s28, 1
      %p32 = scmp.eq.s32.totalorder %s20, 1
      %p33 = scmp.ne.s32.totalorder %s28, %s30
      %p34 = scmp.eq.s32.totalorder %s20, 0
      %p35 = por %p33, %p34
      %p36 = scmp.ne.s32.totalorder %s28, %s30
      %p37 = scmp.eq.s32.totalorder %s25, 1
      %p38 = por %p36, %p37
      %p39 = scmp.ne.s32.totalorder %s30, %s31
      %p40 = scmp.eq.s32.totalorder %s25, 0
      %p41 = por %p39, %p40
      %p42 = scmp.ne.s32.totalorder %s30, %s31
      %p43 = scmp.eq.s32.totalorder %s26, 1
      %p44 = por %p42, %p43
      %p46 = scmp.ne.s32.totalorder %s31, %s45
      %p47 = scmp.eq.s32.totalorder %s26, 0
      %p48 = por %p46, %p47
      %s49 = ssub.s32 %s20, %s27
      %p50 = scmp.eq.s32.totalorder %s49, 0
      %s52 = sadd.s32 %s51, 1
      %s53 = scalar_select %p50, %s51, %s52
      %p56 = pneg %p50
      %p57 = scmp.eq.s32.totalorder %s20, 1
      %p58 = por %p56, %p57
      %p59 = scmp.ne.s32.totalorder %s51, %s54
      %p60 = scmp.eq.s32.totalorder %s20, 0
      %p61 = por %p59, %p60
      %p62 = scmp.ne.s32.totalorder %s51, %s54
      %p63 = scmp.eq.s32.totalorder %s25, 1
      %p64 = por %p62, %p63
      %p65 = scmp.ne.s32.totalorder %s54, %s55
      %p66 = scmp.eq.s32.totalorder %s25, 0
      %p67 = por %p65, %p66
      %p68 = scmp.ne.s32.totalorder %s54, %s55
      %p69 = scmp.eq.s32.totalorder %s26, 1
      %p70 = por %p68, %p69
      %p72 = scmp.ne.s32.totalorder %s55, %s71
      %p73 = scmp.eq.s32.totalorder %s26, 0
      %p74 = por %p72, %p73
      %s75 = ssub.s32 %s20, %s27
      %p76 = scmp.eq.s32.totalorder %s75, 0
      %s78 = sadd.s32 %s77, 1
      %s79 = scalar_select %p76, %s77, %s78
      %p82 = pneg %p76
      %p83 = scmp.eq.s32.totalorder %s20, 1
      %p84 = por %p82, %p83
      %p85 = scmp.ne.s32.totalorder %s77, %s80
      %p86 = scmp.eq.s32.totalorder %s20, 0
      %p87 = por %p85, %p86
      %p88 = scmp.ne.s32.totalorder %s77, %s80
      %p89 = scmp.eq.s32.totalorder %s25, 1
      %p90 = por %p88, %p89
      %p91 = scmp.ne.s32.totalorder %s80, %s81
      %p92 = scmp.eq.s32.totalorder %s25, 0
      %p93 = por %p91, %p92
      %p94 = scmp.ne.s32.totalorder %s80, %s81
      %p95 = scmp.eq.s32.totalorder %s26, 1
      %p96 = por %p94, %p95
      %p98 = scmp.ne.s32.totalorder %s81, %s97
      %p99 = scmp.eq.s32.totalorder %s26, 0
      %p100 = por %p98, %p99
      %s101 = ssub.s32 %s20, %s27
      %p102 = scmp.eq.s32.totalorder %s101, 0
      %s104 = sadd.s32 %s103, 1
      %s105 = scalar_select %p102, %s103, %s104
      %p108 = pneg %p102
      %p109 = scmp.eq.s32.totalorder %s20, 1
      %p110 = por %p108, %p109
      %p111 = scmp.ne.s32.totalorder %s103, %s106
      %p112 = scmp.eq.s32.totalorder %s20, 0
      %p113 = por %p111, %p112
      %p114 = scmp.ne.s32.totalorder %s103, %s106
      %p115 = scmp.eq.s32.totalorder %s25, 1
      %p116 = por %p114, %p115
      %p117 = scmp.ne.s32.totalorder %s106, %s107
      %p118 = scmp.eq.s32.totalorder %s25, 0
      %p119 = por %p117, %p118
      %p120 = scmp.ne.s32.totalorder %s106, %s107
      %p121 = scmp.eq.s32.totalorder %s26, 1
      %p122 = por %p120, %p121
      %p124 = scmp.ne.s32.totalorder %s107, %s123
      %p125 = scmp.eq.s32.totalorder %s26, 0
      %p126 = por %p124, %p125
      %p127 = scmp.le.s32.totalorder 1, %s20
      %p128 = scmp.lt.s32.totalorder %s20, 3
      %p129 = pnand %p127, %p128
      %p130 = pneg %p129
      // Predicated region
      $region9: #{tpu_custom_call.1} parent=5 // pred_check
        _
      $region10: #{tpu_custom_call.1} parent=5 // pred_check_branch
        %132 = sbr.rel (%p129) target = $region12
      $region11: #{tpu_custom_call.1} parent=5 // pred_region
        %s133 = ssub.s32 %s20, 1
        // Predicated region
        $region13: #{tpu_custom_call.1} parent=11 // pred_check
          %p134 = pneg %p41
        $region14: #{tpu_custom_call.1} parent=11 // pred_check_branch
          %136 = sbr.rel (%p134) target = $region16
        $region15: #{tpu_custom_call.1} parent=11 // pred_region
          %s138 = ssub.s32 128, 128
          %139 = vsyncadd [#allocation3], %s138
          %s141 = sshll.u32 [#allocation2], 4
          %s142 = int_to_ptr.vmem [resolvable:$true] %s141
          %144 = dma.hbm_to_vmem [thread:$0]  %s0, 128, %s142, [#allocation3]
        $region16: #{tpu_custom_call.1} parent=11 // pred_fallthru
          _
      $region12: #{tpu_custom_call.1} parent=5 // pred_fallthru
        _
      %p145 = scmp.lt.s32.totalorder %s20, 2
      // Predicated region
      $region17: #{tpu_custom_call.1} parent=5 // pred_check
        %p146 = pneg %p145
      $region18: #{tpu_custom_call.1} parent=5 // pred_check_branch
        %148 = sbr.rel (%p146) target = $region20
      $region19: #{tpu_custom_call.1} parent=5 // pred_region
        // Predicated region
        $region21: #{tpu_custom_call.1} parent=19 // pred_check
          %p149 = pneg %p61
        $region22: #{tpu_custom_call.1} parent=19 // pred_check_branch
          %151 = sbr.rel (%p149) target = $region24
        $region23: #{tpu_custom_call.1} parent=19 // pred_region
          %s152 = sand.u32 %s51, 1
          %s153 = scalar_lea.sflag [#allocation6], %s152
          %s154 = sand.u32 %s51, 1
          %s155 = smul.addr %s154, 32
          %s156 = scalar_lea.vmem [#allocation5], %s155
          %s158 = ssub.s32 512, 512
          %159 = vsyncadd %s153, %s158
          %s160 = smul.addr %s20, 128
          %s161 = scalar_lea.hbm %s1, %s160
          %s162 = sshll.u32 %s156, 4
          %s163 = int_to_ptr.vmem [resolvable:$true] %s162
          %168 = dma.hbm_to_vmem [thread:$0]  %s161, 512, %s163, %s153, 256, 128, 8
        $region24: #{tpu_custom_call.1} parent=19 // pred_fallthru
          _
      $region20: #{tpu_custom_call.1} parent=5 // pred_fallthru
        _
      %p169 = scmp.le.s32.totalorder 1, %s20
      %p170 = scmp.lt.s32.totalorder %s20, 3
      %p171 = pnand %p169, %p170
      %p172 = pneg %p171
      // Predicated region
      $region25: #{tpu_custom_call.1} parent=5 // pred_check
        _
      $region26: #{tpu_custom_call.1} parent=5 // pred_check_branch
        %174 = sbr.rel (%p171) target = $region28
      $region27: #{tpu_custom_call.1} parent=5 // pred_region
        %s175 = ssub.s32 %s20, 1
        // Predicated region
        $region29: #{tpu_custom_call.1} parent=27 // pred_check
          %p176 = pneg %p41
        $region30: #{tpu_custom_call.1} parent=27 // pred_check_branch
          %178 = sbr.rel (%p176) target = $region32
        $region31: #{tpu_custom_call.1} parent=27 // pred_region
          %179 = dma.done [#allocation3], 128
        $region32: #{tpu_custom_call.1} parent=27 // pred_fallthru
          _
        %s180 = sand.u32 %s54, 1
        %s181 = scalar_lea.sflag [#allocation6], %s180
        %s182 = sand.u32 %s54, 1
        %s183 = smul.addr %s182, 32
        %s184 = scalar_lea.vmem [#allocation5], %s183
        // Predicated region
        $region33: #{tpu_custom_call.1} parent=27 // pred_check
          %p185 = pneg %p67
        $region34: #{tpu_custom_call.1} parent=27 // pred_check_branch
          %187 = sbr.rel (%p185) target = $region36
        $region35: #{tpu_custom_call.1} parent=27 // pred_region
          %188 = dma.done %s181, 512
        $region36: #{tpu_custom_call.1} parent=27 // pred_fallthru
          _
        %p189 = pneg %p41
        %p190 = pneg %p38
        %s191 = sand.u32 %s54, 1
        %s192 = scalar_lea.sflag [#allocation6], %s191
        %s193 = sand.u32 %s54, 1
        %s194 = smul.addr %s193, 32
        %s195 = scalar_lea.vmem [#allocation5], %s194
        %p196 = pneg %p67
        %p197 = pneg %p64
        %p198 = pneg %p93
        %p199 = pneg %p90
        %s200 = sand.u32 %s80, 1
        %s201 = scalar_lea.sflag [#allocation4], %s200
        %s202 = sand.u32 %s80, 1
        %s203 = smul.addr %s202, 32
        %s204 = scalar_lea.vmem [#allocation7], %s203
        %p205 = pneg %p119
        %p206 = pneg %p116
        %s207 = sand.u32 %s106, 1
        %s208 = scalar_lea.sflag [#allocation9], %s207
        %s209 = sand.u32 %s106, 1
        %s210 = smul.addr %s209, 8
        %s211 = scalar_lea.vmem [#allocation8], %s210
        %v212 = vld [vmem:[%s184] sm:$0xff]
        %v213 = vld [vmem:[%s184 + $0x8] sm:$0xff]
        %v214 = vld [vmem:[%s184 + $0x10] sm:$0xff]
        %v215 = vld [vmem:[%s184 + $0x18] sm:$0xff]
        %v216 = vld [vmem:[#allocation2] sm:$0xff]
        %vm217 = vcmask 261120
        %v219 = vsel %vm217, %v216, 0
        %221 = vmatprep.subr.mxu0 0.0
        %222 = vmatpush1.msra.mxu0 %v212
        %223 = vmatprep.subr.mxu0 0.0
        %224 = vmatpush1.msra.mxu0 %v213
        %225 = vmatprep.subr.mxu0 0.0
        %226 = vmatpush1.msra.mxu0 %v214
        %227 = vmatprep.subr.mxu0 0.0
        %228 = vmatpush1.msra.mxu0 %v215
        %229 = vmatprep.subr.mxu0 0.0
        %230 = vmatpush1.msra.mxu0 0.0
        %231 = vmatprep.subr.mxu0 0.0
        %232 = vmatpush1.msra.mxu0 0.0
        %233 = vmatprep.subr.mxu0 0.0
        %234 = vmatpush1.msra.mxu0 0.0
        %235 = vmatprep.subr.mxu0 0.0
        %236 = vmatpush1.msra.mxu0 0.0
        %237 = vmatprep.subr.mxu0 0.0
        %238 = vmatpush1.msra.mxu0 0.0
        %239 = vmatprep.subr.mxu0 0.0
        %240 = vmatpush1.msra.mxu0 0.0
        %241 = vmatprep.subr.mxu0 0.0
        %242 = vmatpush1.msra.mxu0 0.0
        %243 = vmatprep.subr.mxu0 0.0
        %244 = vmatpush1.msra.mxu0 0.0
        %245 = vmatprep.subr.mxu0 0.0
        %246 = vmatpush1.msra.mxu0 0.0
        %247 = vmatprep.subr.mxu0 0.0
        %248 = vmatpush1.msra.mxu0 0.0
        %249 = vmatprep.subr.mxu0 0.0
        %250 = vmatpush1.msra.mxu0 0.0
        %251 = vmatprep.subr.mxu0 0.0
        %252 = vmatpush1.msra.mxu0 0.0
        %253 = vmatprep.subr.mxu0 0.0
        %254 = vmatpush1.msra.mxu0 0.0
        %255 = vmatprep.subr.mxu0 0.0
        %256 = vmatpush1.msra.mxu0 0.0
        %257 = vmatprep.subr.mxu0 0.0
        %258 = vmatpush1.msra.mxu0 0.0
        %259 = vmatprep.subr.mxu0 0.0
        %260 = vmatpush1.msra.mxu0 0.0
        %261 = vmatprep.subr.mxu0 0.0
        %262 = vmatpush1.msra.mxu0 0.0
        %263 = vmatprep.subr.mxu0 0.0
        %264 = vmatpush1.msra.mxu0 0.0
        %265 = vmatprep.subr.mxu0 0.0
        %266 = vmatpush1.msra.mxu0 0.0
        %267 = vmatprep.subr.mxu0 0.0
        %268 = vmatpush1.msra.mxu0 0.0
        %269 = vmatprep.subr.mxu0 0.0
        %270 = vmatpush1.msra.mxu0 0.0
        %271 = vmatprep.subr.mxu0 0.0
        %272 = vmatpush1.msra.mxu0 0.0
        %273 = vmatprep.subr.mxu0 0.0
        %274 = vmatpush1.msra.mxu0 0.0
        %275 = vmatprep.subr.mxu0 0.0
        %276 = vmatpush1.msra.mxu0 0.0
        %277 = vmatprep.subr.mxu0 0.0
        %278 = vmatpush1.msra.mxu0 0.0
        %279 = vmatprep.subr.mxu0 0.0
        %280 = vmatpush1.msra.mxu0 0.0
        %281 = vmatprep.subr.mxu0 0.0
        %282 = vmatpush1.msra.mxu0 0.0
        %283 = vmatprep.subr.mxu0 0.0
        %284 = vmatpush1.msra.mxu0 0.0
        %285 = vmatprep.mubr.f32.mxu0 0.0
        %286 = vmatmul.mubr.f32.gmra.mrb[0].mxu0 %v219
        %v287 = vpop.f32.mrb[0].mxu0
        %v288 = vadd.f32 0.0, %v287
        %v289 = vpop.f32.mrb[0].mxu0
        %290 = vdwg.mxu0
        %v291 = vmul.f32 %v212, %v212
        %v292 = vmul.f32 %v213, %v213
        %v293 = vmul.f32 %v214, %v214
        %v294 = vmul.f32 %v215, %v215
        %v295 = vadd.f32 %v291, %v292
        %v296 = vadd.f32 %v295, %v293
        %v297 = vadd.f32 %v296, %v294
        %v298 = vrot.slane %v297, 4
        %v299 = vadd.f32 %v297, %v298
        %v300 = vrot.slane %v299, 2
        %v301 = vadd.f32 %v299, %v300
        %v302 = vrot.slane %v301, 1
        %v303 = vadd.f32 %v301, %v302
        %v304 = vmax.f32 %v303, 1e-24
        %v305 = vrsqrt.pop %v304
        %v306 = vmul.f32 %v212, %v305
        %v307 = vmul.f32 %v213, %v305
        %v308 = vmul.f32 %v214, %v305
        %v309 = vmul.f32 %v215, %v305
        %310 = vst [vmem:[%s204] sm:$0xff] %v306
        %311 = vst [vmem:[%s204 + $0x8] sm:$0xff] %v307
        %312 = vst [vmem:[%s204 + $0x10] sm:$0xff] %v308
        %313 = vst [vmem:[%s204 + $0x18] sm:$0xff] %v309
        %v314 = vmul.f32 %v288, %v305
        %315 = vst [vmem:[%s211] sm:$0xff] %v314
        %s316 = sand.u32 %s80, 1
        %s317 = scalar_lea.sflag [#allocation4], %s316
        %s318 = sand.u32 %s80, 1
        %s319 = smul.addr %s318, 32
        %s320 = scalar_lea.vmem [#allocation7], %s319
        %s321 = sand.u32 %s106, 1
        %s322 = scalar_lea.sflag [#allocation9], %s321
        %s323 = sand.u32 %s106, 1
        %s324 = smul.addr %s323, 8
        %s325 = scalar_lea.vmem [#allocation8], %s324
        // Predicated region
        $region37: #{tpu_custom_call.1} parent=27 // pred_check
          %p326 = pneg %p90
        $region38: #{tpu_custom_call.1} parent=27 // pred_check_branch
          %328 = sbr.rel (%p326) target = $region40
        $region39: #{tpu_custom_call.1} parent=27 // pred_region
          %s330 = ssub.s32 512, 512
          %331 = vsyncadd %s317, %s330
          %s332 = smul.addr %s25, 128
          %s333 = scalar_lea.hbm %s2, %s332
          %s334 = sshll.u32 %s320, 4
          %s335 = int_to_ptr.vmem [resolvable:$true] %s334
          %340 = dma.vmem_to_hbm [thread:$0]  %s335, 512, %s333, %s317, 128, 256, 8
        $region40: #{tpu_custom_call.1} parent=27 // pred_fallthru
          _
        // Predicated region
        $region41: #{tpu_custom_call.1} parent=27 // pred_check
          %p341 = pneg %p116
        $region42: #{tpu_custom_call.1} parent=27 // pred_check_branch
          %343 = sbr.rel (%p341) target = $region44
        $region43: #{tpu_custom_call.1} parent=27 // pred_region
          %s345 = ssub.s32 128, 128
          %346 = vsyncadd %s322, %s345
          %s347 = smul.addr %s25, 128
          %s348 = scalar_lea.hbm %s3, %s347
          %s350 = sshll.u32 %s325, 4
          %s351 = int_to_ptr.vmem [resolvable:$true] %s350
          %353 = dma.vmem_to_hbm [thread:$0]  %s351, 128, %s348, %s322
        $region44: #{tpu_custom_call.1} parent=27 // pred_fallthru
          _
      $region28: #{tpu_custom_call.1} parent=5 // pred_fallthru
        _
      %p354 = scmp.le.s32.totalorder 2, %s20
      // Predicated region
      $region45: #{tpu_custom_call.1} parent=5 // pred_check
        %p355 = pneg %p354
      $region46: #{tpu_custom_call.1} parent=5 // pred_check_branch
        %357 = sbr.rel (%p355) target = $region48
      $region47: #{tpu_custom_call.1} parent=5 // pred_region
        %s358 = ssub.s32 %s20, 2
        // Predicated region
        $region49: #{tpu_custom_call.1} parent=47 // pred_check
          %p359 = pneg %p96
        $region50: #{tpu_custom_call.1} parent=47 // pred_check_branch
          %361 = sbr.rel (%p359) target = $region52
        $region51: #{tpu_custom_call.1} parent=47 // pred_region
          %s362 = sand.u32 %s81, 1
          %s363 = scalar_lea.sflag [#allocation4], %s362
          %s364 = sand.u32 %s81, 1
          %s365 = smul.addr %s364, 32
          %s366 = scalar_lea.vmem [#allocation7], %s365
          %367 = dma.done %s363, 512
        $region52: #{tpu_custom_call.1} parent=47 // pred_fallthru
          _
        // Predicated region
        $region53: #{tpu_custom_call.1} parent=47 // pred_check
          %p368 = pneg %p122
        $region54: #{tpu_custom_call.1} parent=47 // pred_check_branch
          %370 = sbr.rel (%p368) target = $region56
        $region55: #{tpu_custom_call.1} parent=47 // pred_region
          %s371 = sand.u32 %s107, 1
          %s372 = scalar_lea.sflag [#allocation9], %s371
          %s373 = sand.u32 %s107, 1
          %s374 = smul.addr %s373, 8
          %s375 = scalar_lea.vmem [#allocation8], %s374
          %376 = dma.done %s372, 128
        $region56: #{tpu_custom_call.1} parent=47 // pred_fallthru
          _
      $region48: #{tpu_custom_call.1} parent=5 // pred_fallthru
        _
    $region6: #{tpu_custom_call.1} parent=1 // loop_footer
      %s24 = sadd.s32 1, %s20
    $region7: #{tpu_custom_call.1} parent=1 // loop_footer_branch
      %19 = sbr.rel target = $region3
    $region8: #{tpu_custom_call.1} parent=1 // loop_exit
      _
    %377 = vsyncpa [#allocation3], 1
    %s378 = scalar_lea.sflag [#allocation3], 1
    %379 = vsyncpa %s378, 1
    %380 = vsyncpa [#allocation6], 1
    %s381 = scalar_lea.sflag [#allocation6], 1
    %382 = vsyncpa %s381, 1
    %383 = vsyncpa [#allocation4], 1
    %s384 = scalar_lea.sflag [#allocation4], 1
    %385 = vsyncpa %s384, 1
    %386 = vsyncpa [#allocation9], 1
    %s387 = scalar_lea.sflag [#allocation9], 1
    %388 = vsyncpa %s387, 1

// kernel: tpu_custom_call.1
$region0: #{tpu_custom_call.1}
  #allocation0 [shape = 'u32[]', space=smem, size = 0x4, offset = 0x4, fixed_abs, tag = 'smem constant byte address 0x4 - core index']
  #allocation1 [shape = 'u32[144,128]{1,0:T(1,128)}', space=vmem, size = 0x12000, scoped, tag = 'internal scratch']
  %s0 = inlined_call_operand.hbm [shape: f32[8,32], index: 0, kind: input, shape index: {}]
  %s1 = inlined_call_operand.hbm [shape: f32[32,256], index: 1, kind: input, shape index: {}]
  %s2 = inlined_call_operand.hbm [shape: f32[32,256], index: 2, kind: output, shape index: {0}]
  %s3 = inlined_call_operand.hbm [shape: f32[8,256], index: 3, kind: output, shape index: {1}]
  %4 = xla_tuple %s2, %s3
  %s5 = sld [smem:[#allocation0]]
  $region57: #{tpu_custom_call.1} parent=0
    _
  %s7 = ssub.s32 1, %s5
  %s8 = scalar_select 0, %s7, %s5
  $region1: #{tpu_custom_call.1} parent=0
    #allocation2 [shape = 'u8[4096]{0}', space=vmem, size = 0x1000, scoped, tag = 'input window, operand 0, single buffered']
    #allocation3 [shape = 's32[2]{0}', space=sflag, size = 0x8, scoped, tag = 'scoped memory for tpu_custom_call.1']
    #allocation4 [shape = 's32[2]{0}', space=sflag, size = 0x8, scoped, tag = 'scoped memory for tpu_custom_call.1']
    #allocation5 [shape = 'u8[32768]{0}', space=vmem, size = 0x8000, scoped, tag = 'input window, operand 1']
    #allocation6 [shape = 's32[2]{0}', space=sflag, size = 0x8, scoped, tag = 'scoped memory for tpu_custom_call.1']
    #allocation7 [shape = 'u8[32768]{0}', space=vmem, size = 0x8000, scoped, tag = 'output window, operand 0']
    #allocation8 [shape = 'u8[8192]{0}', space=vmem, size = 0x2000, scoped, tag = 'output window, operand 1']
    #allocation9 [shape = 's32[2]{0}', space=sflag, size = 0x8, scoped, tag = 'scoped memory for tpu_custom_call.1']
    %9 = vsyncpa [#allocation3], 0
    %10 = vsyncpa [#allocation6], 0
    %s11 = scalar_lea.sflag [#allocation6], 1
    %12 = vsyncpa %s11, 0
    %13 = vsyncpa [#allocation4], 0
    %s14 = scalar_lea.sflag [#allocation4], 1
    %15 = vsyncpa %s14, 0
    %16 = vsyncpa [#allocation9], 0
    %s17 = scalar_lea.sflag [#allocation9], 1
    %18 = vsyncpa %s17, 0
    loop: start=0, step=1, limit=4
    $region2: #{tpu_custom_call.1} parent=1 // loop_pre_header
      _
    $region3: #{tpu_custom_call.1} parent=1 // loop_header
      %s20 = sphi 0, %s24
      %p21 = scmp.ge.s32.totalorder %s20, 4
      %s28 = sphi 0, %s28
      %s30 = sphi 0, %s28
      %s31 = sphi 0, %s30
      %s45 = sphi 0, %s31
      %s51 = sphi 0, %s53
      %s54 = sphi 0, %s51
      %s55 = sphi 0, %s54
      %s71 = sphi 0, %s55
      %s77 = sphi 0, %s79
      %s80 = sphi 0, %s77
      %s81 = sphi 0, %s80
      %s97 = sphi 0, %s81
      %s103 = sphi 0, %s105
      %s106 = sphi 0, %s103
      %s107 = sphi 0, %s106
      %s123 = sphi 0, %s107
    $region4: #{tpu_custom_call.1} parent=1 // loop_header_branch
      %23 = sbr.rel (%p21) target = $region8
    $region5: #{tpu_custom_call.1} parent=1 // loop_body
      %s25 = ssub.s32 %s20, 1
      %s26 = ssub.s32 %s20, 2
      %s27 = sadd.s32 %s20, 1
      %s29 = sadd.s32 %s28, 1
      %p32 = scmp.eq.s32.totalorder %s20, 1
      %p33 = scmp.ne.s32.totalorder %s28, %s30
      %p34 = scmp.eq.s32.totalorder %s20, 0
      %p35 = por %p33, %p34
      %p36 = scmp.ne.s32.totalorder %s28, %s30
      %p37 = scmp.eq.s32.totalorder %s25, 1
      %p38 = por %p36, %p37
      %p39 = scmp.ne.s32.totalorder %s30, %s31
      %p40 = scmp.eq.s32.totalorder %s25, 0
      %p41 = por %p39, %p40
      %p42 = scmp.ne.s32.totalorder %s30, %s31
      %p43 = scmp.eq.s32.totalorder %s26, 1
      %p44 = por %p42, %p43
      %p46 = scmp.ne.s32.totalorder %s31, %s45
      %p47 = scmp.eq.s32.totalorder %s26, 0
      %p48 = por %p46, %p47
      %s49 = ssub.s32 %s20, %s27
      %p50 = scmp.eq.s32.totalorder %s49, 0
      %s52 = sadd.s32 %s51, 1
      %s53 = scalar_select %p50, %s51, %s52
      %p56 = pneg %p50
      %p57 = scmp.eq.s32.totalorder %s20, 1
      %p58 = por %p56, %p57
      %p59 = scmp.ne.s32.totalorder %s51, %s54
      %p60 = scmp.eq.s32.totalorder %s20, 0
      %p61 = por %p59, %p60
      %p62 = scmp.ne.s32.totalorder %s51, %s54
      %p63 = scmp.eq.s32.totalorder %s25, 1
      %p64 = por %p62, %p63
      %p65 = scmp.ne.s32.totalorder %s54, %s55
      %p66 = scmp.eq.s32.totalorder %s25, 0
      %p67 = por %p65, %p66
      %p68 = scmp.ne.s32.totalorder %s54, %s55
      %p69 = scmp.eq.s32.totalorder %s26, 1
      %p70 = por %p68, %p69
      %p72 = scmp.ne.s32.totalorder %s55, %s71
      %p73 = scmp.eq.s32.totalorder %s26, 0
      %p74 = por %p72, %p73
      %s75 = ssub.s32 %s20, %s27
      %p76 = scmp.eq.s32.totalorder %s75, 0
      %s78 = sadd.s32 %s77, 1
      %s79 = scalar_select %p76, %s77, %s78
      %p82 = pneg %p76
      %p83 = scmp.eq.s32.totalorder %s20, 1
      %p84 = por %p82, %p83
      %p85 = scmp.ne.s32.totalorder %s77, %s80
      %p86 = scmp.eq.s32.totalorder %s20, 0
      %p87 = por %p85, %p86
      %p88 = scmp.ne.s32.totalorder %s77, %s80
      %p89 = scmp.eq.s32.totalorder %s25, 1
      %p90 = por %p88, %p89
      %p91 = scmp.ne.s32.totalorder %s80, %s81
      %p92 = scmp.eq.s32.totalorder %s25, 0
      %p93 = por %p91, %p92
      %p94 = scmp.ne.s32.totalorder %s80, %s81
      %p95 = scmp.eq.s32.totalorder %s26, 1
      %p96 = por %p94, %p95
      %p98 = scmp.ne.s32.totalorder %s81, %s97
      %p99 = scmp.eq.s32.totalorder %s26, 0
      %p100 = por %p98, %p99
      %s101 = ssub.s32 %s20, %s27
      %p102 = scmp.eq.s32.totalorder %s101, 0
      %s104 = sadd.s32 %s103, 1
      %s105 = scalar_select %p102, %s103, %s104
      %p108 = pneg %p102
      %p109 = scmp.eq.s32.totalorder %s20, 1
      %p110 = por %p108, %p109
      %p111 = scmp.ne.s32.totalorder %s103, %s106
      %p112 = scmp.eq.s32.totalorder %s20, 0
      %p113 = por %p111, %p112
      %p114 = scmp.ne.s32.totalorder %s103, %s106
      %p115 = scmp.eq.s32.totalorder %s25, 1
      %p116 = por %p114, %p115
      %p117 = scmp.ne.s32.totalorder %s106, %s107
      %p118 = scmp.eq.s32.totalorder %s25, 0
      %p119 = por %p117, %p118
      %p120 = scmp.ne.s32.totalorder %s106, %s107
      %p121 = scmp.eq.s32.totalorder %s26, 1
      %p122 = por %p120, %p121
      %p124 = scmp.ne.s32.totalorder %s107, %s123
      %p125 = scmp.eq.s32.totalorder %s26, 0
      %p126 = por %p124, %p125
      %p127 = scmp.le.s32.totalorder 1, %s20
      %p128 = scmp.lt.s32.totalorder %s20, 3
      %p129 = pnand %p127, %p128
      %p130 = pneg %p129
      // Predicated region
      $region9: #{tpu_custom_call.1} parent=5 // pred_check
        _
      $region10: #{tpu_custom_call.1} parent=5 // pred_check_branch
        %132 = sbr.rel (%p129) target = $region12
      $region11: #{tpu_custom_call.1} parent=5 // pred_region
        %s133 = ssub.s32 %s20, 1
        // Predicated region
        $region13: #{tpu_custom_call.1} parent=11 // pred_check
          %p134 = pneg %p41
        $region14: #{tpu_custom_call.1} parent=11 // pred_check_branch
          %136 = sbr.rel (%p134) target = $region16
        $region15: #{tpu_custom_call.1} parent=11 // pred_region
          %s138 = ssub.s32 128, 128
          %139 = vsyncadd [#allocation3], %s138
          %s141 = sshll.u32 [#allocation2], 4
          %s142 = int_to_ptr.vmem [resolvable:$true] %s141
          %144 = dma.hbm_to_vmem [thread:$0]  %s0, 128, %s142, [#allocation3]
        $region16: #{tpu_custom_call.1} parent=11 // pred_fallthru
          _
      $region12: #{tpu_custom_call.1} parent=5 // pred_fallthru
        _
      %p145 = scmp.lt.s32.totalorder %s20, 2
      // Predicated region
      $region17: #{tpu_custom_call.1} parent=5 // pred_check
        %p146 = pneg %p145
      $region18: #{tpu_custom_call.1} parent=5 // pred_check_branch
        %148 = sbr.rel (%p146) target = $region20
      $region19: #{tpu_custom_call.1} parent=5 // pred_region
        // Predicated region
        $region21: #{tpu_custom_call.1} parent=19 // pred_check
          %p149 = pneg %p61
        $region22: #{tpu_custom_call.1} parent=19 // pred_check_branch
          %151 = sbr.rel (%p149) target = $region24
        $region23: #{tpu_custom_call.1} parent=19 // pred_region
          %s152 = sand.u32 %s51, 1
          %s153 = scalar_lea.sflag [#allocation6], %s152
          %s154 = sand.u32 %s51, 1
          %s155 = smul.addr %s154, 32
          %s156 = scalar_lea.vmem [#allocation5], %s155
          %s158 = ssub.s32 512, 512
          %159 = vsyncadd %s153, %s158
          %s160 = smul.addr %s20, 128
          %s161 = scalar_lea.hbm %s1, %s160
          %s162 = sshll.u32 %s156, 4
          %s163 = int_to_ptr.vmem [resolvable:$true] %s162
          %168 = dma.hbm_to_vmem [thread:$0]  %s161, 512, %s163, %s153, 256, 128, 8
        $region24: #{tpu_custom_call.1} parent=19 // pred_fallthru
          _
      $region20: #{tpu_custom_call.1} parent=5 // pred_fallthru
        _
      %p169 = scmp.le.s32.totalorder 1, %s20
      %p170 = scmp.lt.s32.totalorder %s20, 3
      %p171 = pnand %p169, %p170
      %p172 = pneg %p171
      // Predicated region
      $region25: #{tpu_custom_call.1} parent=5 // pred_check
        _
      $region26: #{tpu_custom_call.1} parent=5 // pred_check_branch
        %174 = sbr.rel (%p171) target = $region28
      $region27: #{tpu_custom_call.1} parent=5 // pred_region
        %s175 = ssub.s32 %s20, 1
        // Predicated region
        $region29: #{tpu_custom_call.1} parent=27 // pred_check
          %p176 = pneg %p41
        $region30: #{tpu_custom_call.1} parent=27 // pred_check_branch
          %178 = sbr.rel (%p176) target = $region32
        $region31: #{tpu_custom_call.1} parent=27 // pred_region
          %179 = dma.done [#allocation3], 128
        $region32: #{tpu_custom_call.1} parent=27 // pred_fallthru
          _
        %s180 = sand.u32 %s54, 1
        %s181 = scalar_lea.sflag [#allocation6], %s180
        %s182 = sand.u32 %s54, 1
        %s183 = smul.addr %s182, 32
        %s184 = scalar_lea.vmem [#allocation5], %s183
        // Predicated region
        $region33: #{tpu_custom_call.1} parent=27 // pred_check
          %p185 = pneg %p67
        $region34: #{tpu_custom_call.1} parent=27 // pred_check_branch
          %187 = sbr.rel (%p185) target = $region36
        $region35: #{tpu_custom_call.1} parent=27 // pred_region
          %188 = dma.done %s181, 512
        $region36: #{tpu_custom_call.1} parent=27 // pred_fallthru
          _
        %p189 = pneg %p41
        %p190 = pneg %p38
        %s191 = sand.u32 %s54, 1
        %s192 = scalar_lea.sflag [#allocation6], %s191
        %s193 = sand.u32 %s54, 1
        %s194 = smul.addr %s193, 32
        %s195 = scalar_lea.vmem [#allocation5], %s194
        %p196 = pneg %p67
        %p197 = pneg %p64
        %p198 = pneg %p93
        %p199 = pneg %p90
        %s200 = sand.u32 %s80, 1
        %s201 = scalar_lea.sflag [#allocation4], %s200
        %s202 = sand.u32 %s80, 1
        %s203 = smul.addr %s202, 32
        %s204 = scalar_lea.vmem [#allocation7], %s203
        %p205 = pneg %p119
        %p206 = pneg %p116
        %s207 = sand.u32 %s106, 1
        %s208 = scalar_lea.sflag [#allocation9], %s207
        %s209 = sand.u32 %s106, 1
        %s210 = smul.addr %s209, 8
        %s211 = scalar_lea.vmem [#allocation8], %s210
        %v212 = vld [vmem:[%s184] sm:$0xff]
        %v213 = vld [vmem:[%s184 + $0x8] sm:$0xff]
        %v214 = vld [vmem:[%s184 + $0x10] sm:$0xff]
        %v215 = vld [vmem:[%s184 + $0x18] sm:$0xff]
        %v216 = vld [vmem:[#allocation2] sm:$0xff]
        %vm217 = vcmask 261120
        %v219 = vsel %vm217, %v216, 0
        %221 = vmatprep.subr.mxu0 0.0
        %222 = vmatpush1.msra.mxu0 %v212
        %223 = vmatprep.subr.mxu0 0.0
        %224 = vmatpush1.msra.mxu0 %v213
        %225 = vmatprep.subr.mxu0 0.0
        %226 = vmatpush1.msra.mxu0 %v214
        %227 = vmatprep.subr.mxu0 0.0
        %228 = vmatpush1.msra.mxu0 %v215
        %229 = vmatprep.subr.mxu0 0.0
        %230 = vmatpush1.msra.mxu0 0.0
        %231 = vmatprep.subr.mxu0 0.0
        %232 = vmatpush1.msra.mxu0 0.0
        %233 = vmatprep.subr.mxu0 0.0
        %234 = vmatpush1.msra.mxu0 0.0
        %235 = vmatprep.subr.mxu0 0.0
        %236 = vmatpush1.msra.mxu0 0.0
        %237 = vmatprep.subr.mxu0 0.0
        %238 = vmatpush1.msra.mxu0 0.0
        %239 = vmatprep.subr.mxu0 0.0
        %240 = vmatpush1.msra.mxu0 0.0
        %241 = vmatprep.subr.mxu0 0.0
        %242 = vmatpush1.msra.mxu0 0.0
        %243 = vmatprep.subr.mxu0 0.0
        %244 = vmatpush1.msra.mxu0 0.0
        %245 = vmatprep.subr.mxu0 0.0
        %246 = vmatpush1.msra.mxu0 0.0
        %247 = vmatprep.subr.mxu0 0.0
        %248 = vmatpush1.msra.mxu0 0.0
        %249 = vmatprep.subr.mxu0 0.0
        %250 = vmatpush1.msra.mxu0 0.0
        %251 = vmatprep.subr.mxu0 0.0
        %252 = vmatpush1.msra.mxu0 0.0
        %253 = vmatprep.subr.mxu0 0.0
        %254 = vmatpush1.msra.mxu0 0.0
        %255 = vmatprep.subr.mxu0 0.0
        %256 = vmatpush1.msra.mxu0 0.0
        %257 = vmatprep.subr.mxu0 0.0
        %258 = vmatpush1.msra.mxu0 0.0
        %259 = vmatprep.subr.mxu0 0.0
        %260 = vmatpush1.msra.mxu0 0.0
        %261 = vmatprep.subr.mxu0 0.0
        %262 = vmatpush1.msra.mxu0 0.0
        %263 = vmatprep.subr.mxu0 0.0
        %264 = vmatpush1.msra.mxu0 0.0
        %265 = vmatprep.subr.mxu0 0.0
        %266 = vmatpush1.msra.mxu0 0.0
        %267 = vmatprep.subr.mxu0 0.0
        %268 = vmatpush1.msra.mxu0 0.0
        %269 = vmatprep.subr.mxu0 0.0
        %270 = vmatpush1.msra.mxu0 0.0
        %271 = vmatprep.subr.mxu0 0.0
        %272 = vmatpush1.msra.mxu0 0.0
        %273 = vmatprep.subr.mxu0 0.0
        %274 = vmatpush1.msra.mxu0 0.0
        %275 = vmatprep.subr.mxu0 0.0
        %276 = vmatpush1.msra.mxu0 0.0
        %277 = vmatprep.subr.mxu0 0.0
        %278 = vmatpush1.msra.mxu0 0.0
        %279 = vmatprep.subr.mxu0 0.0
        %280 = vmatpush1.msra.mxu0 0.0
        %281 = vmatprep.subr.mxu0 0.0
        %282 = vmatpush1.msra.mxu0 0.0
        %283 = vmatprep.subr.mxu0 0.0
        %284 = vmatpush1.msra.mxu0 0.0
        %285 = vmatprep.mubr.f32.mxu0 0.0
        %286 = vmatmul.mubr.f32.gmra.mrb[0].mxu0 %v219
        %v287 = vpop.f32.mrb[0].mxu0
        %v288 = vadd.f32 0.0, %v287
        %v289 = vpop.f32.mrb[0].mxu0
        %290 = vdwg.mxu0
        %v291 = vmul.f32 %v212, %v212
        %v292 = vmul.f32 %v213, %v213
        %v293 = vmul.f32 %v214, %v214
        %v294 = vmul.f32 %v215, %v215
        %v295 = vadd.f32 %v291, %v292
        %v296 = vadd.f32 %v295, %v293
        %v297 = vadd.f32 %v296, %v294
        %v298 = vrot.slane %v297, 4
        %v299 = vadd.f32 %v297, %v298
        %v300 = vrot.slane %v299, 2
        %v301 = vadd.f32 %v299, %v300
        %v302 = vrot.slane %v301, 1
        %v303 = vadd.f32 %v301, %v302
        %v304 = vmax.f32 %v303, 1e-24
        %v305 = vrsqrt.pop %v304
        %v306 = vmul.f32 %v212, %v305
        %v307 = vmul.f32 %v213, %v305
        %v308 = vmul.f32 %v214, %v305
        %v309 = vmul.f32 %v215, %v305
        %310 = vst [vmem:[%s204] sm:$0xff] %v306
        %311 = vst [vmem:[%s204 + $0x8] sm:$0xff] %v307
        %312 = vst [vmem:[%s204 + $0x10] sm:$0xff] %v308
        %313 = vst [vmem:[%s204 + $0x18] sm:$0xff] %v309
        %v314 = vmul.f32 %v288, %v305
        %315 = vst [vmem:[%s211] sm:$0xff] %v314
        %s316 = sand.u32 %s80, 1
        %s317 = scalar_lea.sflag [#allocation4], %s316
        %s318 = sand.u32 %s80, 1
        %s319 = smul.addr %s318, 32
        %s320 = scalar_lea.vmem [#allocation7], %s319
        %s321 = sand.u32 %s106, 1
        %s322 = scalar_lea.sflag [#allocation9], %s321
        %s323 = sand.u32 %s106, 1
        %s324 = smul.addr %s323, 8
        %s325 = scalar_lea.vmem [#allocation8], %s324
        // Predicated region
        $region37: #{tpu_custom_call.1} parent=27 // pred_check
          %p326 = pneg %p90
        $region38: #{tpu_custom_call.1} parent=27 // pred_check_branch
          %328 = sbr.rel (%p326) target = $region40
        $region39: #{tpu_custom_call.1} parent=27 // pred_region
          %s330 = ssub.s32 512, 512
          %331 = vsyncadd %s317, %s330
          %s332 = smul.addr %s25, 128
          %s333 = scalar_lea.hbm %s2, %s332
          %s334 = sshll.u32 %s320, 4
          %s335 = int_to_ptr.vmem [resolvable:$true] %s334
          %340 = dma.vmem_to_hbm [thread:$0]  %s335, 512, %s333, %s317, 128, 256, 8
        $region40: #{tpu_custom_call.1} parent=27 // pred_fallthru
          _
        // Predicated region
        $region41: #{tpu_custom_call.1} parent=27 // pred_check
          %p341 = pneg %p116
        $region42: #{tpu_custom_call.1} parent=27 // pred_check_branch
          %343 = sbr.rel (%p341) target = $region44
        $region43: #{tpu_custom_call.1} parent=27 // pred_region
          %s345 = ssub.s32 128, 128
          %346 = vsyncadd %s322, %s345
          %s347 = smul.addr %s25, 128
          %s348 = scalar_lea.hbm %s3, %s347
          %s350 = sshll.u32 %s325, 4
          %s351 = int_to_ptr.vmem [resolvable:$true] %s350
          %353 = dma.vmem_to_hbm [thread:$0]  %s351, 128, %s348, %s322
        $region44: #{tpu_custom_call.1} parent=27 // pred_fallthru
          _
      $region28: #{tpu_custom_call.1} parent=5 // pred_fallthru
        _
      %p354 = scmp.le.s32.totalorder 2, %s20
      // Predicated region
      $region45: #{tpu_custom_call.1} parent=5 // pred_check
        %p355 = pneg %p354
      $region46: #{tpu_custom_call.1} parent=5 // pred_check_branch
        %357 = sbr.rel (%p355) target = $region48
      $region47: #{tpu_custom_call.1} parent=5 // pred_region
        %s358 = ssub.s32 %s20, 2
        // Predicated region
        $region49: #{tpu_custom_call.1} parent=47 // pred_check
          %p359 = pneg %p96
        $region50: #{tpu_custom_call.1} parent=47 // pred_check_branch
          %361 = sbr.rel (%p359) target = $region52
        $region51: #{tpu_custom_call.1} parent=47 // pred_region
          %s362 = sand.u32 %s81, 1
          %s363 = scalar_lea.sflag [#allocation4], %s362
          %s364 = sand.u32 %s81, 1
          %s365 = smul.addr %s364, 32
          %s366 = scalar_lea.vmem [#allocation7], %s365
          %367 = dma.done %s363, 512
        $region52: #{tpu_custom_call.1} parent=47 // pred_fallthru
          _
        // Predicated region
        $region53: #{tpu_custom_call.1} parent=47 // pred_check
          %p368 = pneg %p122
        $region54: #{tpu_custom_call.1} parent=47 // pred_check_branch
          %370 = sbr.rel (%p368) target = $region56
        $region55: #{tpu_custom_call.1} parent=47 // pred_region
          %s371 = sand.u32 %s107, 1
          %s372 = scalar_lea.sflag [#allocation9], %s371
          %s373 = sand.u32 %s107, 1
          %s374 = smul.addr %s373, 8
          %s375 = scalar_lea.vmem [#allocation8], %s374
          %376 = dma.done %s372, 128
        $region56: #{tpu_custom_call.1} parent=47 // pred_fallthru
          _
      $region48: #{tpu_custom_call.1} parent=5 // pred_fallthru
        _
    $region6: #{tpu_custom_call.1} parent=1 // loop_footer
      %s24 = sadd.s32 1, %s20
    $region7: #{tpu_custom_call.1} parent=1 // loop_footer_branch
      %19 = sbr.rel target = $region3
    $region8: #{tpu_custom_call.1} parent=1 // loop_exit
      _
    %377 = vsyncpa [#allocation3], 1
    %s378 = scalar_lea.sflag [#allocation3], 1
    %379 = vsyncpa %s378, 1
    %380 = vsyncpa [#allocation6], 1
    %s381 = scalar_lea.sflag [#allocation6], 1
    %382 = vsyncpa %s381, 1
    %383 = vsyncpa [#allocation4], 1
    %s384 = scalar_lea.sflag [#allocation4], 1
    %385 = vsyncpa %s384, 1
    %386 = vsyncpa [#allocation9], 1
    %s387 = scalar_lea.sflag [#allocation9], 1
    %388 = vsyncpa %s387, 1

</llo_original>
